<compile_context>
chip_gen: v7x
topology: tpu7x:2x2x1
jax: 0.10.0
libtpu: 0.0.40
codegen_flags: <defaults>
</compile_context>

<pallas_src>
import jax
import jax.numpy as jnp
from jax.experimental import pallas as pl
from jax.experimental.pallas import tpu as pltpu

HIDDEN = 128      # every hidden layer's feature dim is zero-padded to this
NUM_MID = 3       # fc2, fc3, fc4 live as full (128, 128) tiles in the slab
OUT_ROWS = 8      # output layer rows padded to one sublane group
NUM_LAYERS = 5    # fc1..fc4 + out
BIAS_COLS = 8     # (128, 8) f32 bias slab; column l = bias of layer l


def _round_up(x, m):
    return (x + m - 1) // m * m


def snakenet_kernel(x_ref, w1_ref, wrest_ref, bias_ref, o_ref):
    """Fused forward pass for one batch tile (feature-major).

    x_ref     : (in_pad, tb)        f32, batch on lanes
    w1_ref    : (128, in_pad)       fc1 weight, native (out, in) orientation
    wrest_ref : (3*128 + 8, 128)    fc2..fc4 zero-padded to 128x128, out to 8x128
    bias_ref  : (128, 8)            f32; column l = bias of layer l (zero-padded)
    o_ref     : (8, tb)             f32 lane-dense output slab
    """
    w_dtype = w1_ref.dtype

    # fc1: (128, in_pad) @ (in_pad, tb); bias + ReLU fused in one VPU pass.
    h = jnp.maximum(
        jnp.dot(w1_ref[...], x_ref[...].astype(w_dtype),
                preferred_element_type=jnp.float32)
        + bias_ref[:, 0:1],
        0.0)

    # fc2..fc4: (128,128) @ (128,tb). Zero-padded rows/cols stay exactly zero
    # through every ReLU (zero weights + zero bias), so no masking is needed.
    for l in range(NUM_MID):
        w = wrest_ref[l * HIDDEN:(l + 1) * HIDDEN, :]
        h = jnp.maximum(
            jnp.dot(w, h.astype(w_dtype), preferred_element_type=jnp.float32)
            + bias_ref[:, l + 1:l + 2],
            0.0)

    # Output layer (no ReLU): (8,128) @ (128,tb) -> lane-dense (8, tb) store.
    w_out = wrest_ref[NUM_MID * HIDDEN:NUM_MID * HIDDEN + OUT_ROWS, :]
    o_ref[...] = (
        jnp.dot(w_out, h.astype(w_dtype), preferred_element_type=jnp.float32)
        + bias_ref[:OUT_ROWS, NUM_MID + 1:NUM_MID + 2]
    ).astype(o_ref.dtype)


def pack_snakenet_params(params, dtype=jnp.bfloat16):
    """ONE-TIME packing (hoisted off the per-call path).

    params: list of 5 (W, b) with W in PyTorch (out_features, in_features)
    layout. Weights keep their native orientation (feature-major kernel needs
    no transpose); biases are always packed in f32.
    bf16 is the default weight dtype on all generations (f32 accumulation is
    kept via preferred_element_type); pass dtype=jnp.float32 for exactness.
    """
    assert len(params) == NUM_LAYERS
    w1, _ = params[0]
    in_size = w1.shape[1]
    out_size = params[-1][0].shape[0]
    assert out_size <= OUT_ROWS, "output_size must fit in the 8-row output slab"
    in_pad = _round_up(in_size, 8)

    w1_p = jnp.zeros((HIDDEN, in_pad), dtype)
    w1_p = w1_p.at[:, :in_size].set(jnp.asarray(w1, dtype))          # (128, in_pad)

    w_rest = jnp.zeros((NUM_MID * HIDDEN + OUT_ROWS, HIDDEN), dtype)  # (392, 128)
    for l, (w, _) in enumerate(params[1:1 + NUM_MID]):                # fc2..fc4
        w = jnp.asarray(w, dtype)
        assert w.shape[0] <= HIDDEN and w.shape[1] <= HIDDEN
        w_rest = w_rest.at[l * HIDDEN:l * HIDDEN + w.shape[0],
                           :w.shape[1]].set(w)
    w_out = jnp.asarray(params[-1][0], dtype)                         # (out_size, 16)
    w_rest = w_rest.at[NUM_MID * HIDDEN:NUM_MID * HIDDEN + w_out.shape[0],
                       :w_out.shape[1]].set(w_out)

    bias = jnp.zeros((HIDDEN, BIAS_COLS), jnp.float32)                # (128, 8) f32
    for l, (_, b) in enumerate(params):
        b = jnp.asarray(b, jnp.float32)
        bias = bias.at[:b.shape[0], l].set(b)

    return {"w1": w1_p, "w_rest": w_rest, "bias": bias,
            "in_size": in_size, "in_pad": in_pad, "out_size": out_size}


def _choose_batch_tile(batch, tile_b):
    """Lane-dim batch tile: multiple of 128, <= tile_b, grid >= 2 when possible."""
    lane_tiles = max(1, pl.cdiv(batch, 128))
    tb_tiles = max(1, min(max(tile_b, 128) // 128, lane_tiles))
    if lane_tiles >= 2:                      # keep both v7x TensorCores busy
        tb_tiles = min(tb_tiles, pl.cdiv(lane_tiles, 2))
    return tb_tiles * 128


def snakenet_forward(x, packed, *, tile_b=512):
    """x: (batch, in_size) f32. packed: output of pack_snakenet_params."""
    batch, in_size = x.shape
    assert in_size == packed["in_size"]
    in_pad = packed["in_pad"]
    out_size = packed["out_size"]

    tb = _choose_batch_tile(batch, tile_b)
    padded_batch = _round_up(batch, tb)

    # Feature-major input slab: (in_pad, padded_batch), zero padded.
    x_t = jnp.pad(x, ((0, padded_batch - batch), (0, in_pad - in_size))).T

    out = pl.pallas_call(
        snakenet_kernel,
        out_shape=jax.ShapeDtypeStruct((OUT_ROWS, padded_batch), jnp.float32),
        grid=(padded_batch // tb,),
        in_specs=[
            pl.BlockSpec((in_pad, tb), lambda i: (0, i)),                  # x^T: tiled on lanes
            pl.BlockSpec((HIDDEN, in_pad), lambda i: (0, 0)),              # fc1 W: resident
            pl.BlockSpec((NUM_MID * HIDDEN + OUT_ROWS, HIDDEN),
                         lambda i: (0, 0)),                                # W slab: resident
            pl.BlockSpec((HIDDEN, BIAS_COLS), lambda i: (0, 0)),           # bias slab: resident
        ],
        out_specs=pl.BlockSpec((OUT_ROWS, tb), lambda i: (0, i)),
        compiler_params=pltpu.CompilerParams(
            dimension_semantics=("parallel",)),
    )(x_t, packed["w1"], packed["w_rest"], packed["bias"])

    # Padded batch columns hold ReLU(bias)-propagated garbage; slice them off.
    return out[:out_size, :batch].T


def init_params(key, input_size, output_size):
    """Deterministic init matching PyTorch nn.Linear shapes:
    W ~ U(-1/sqrt(fan_in), 1/sqrt(fan_in)), b likewise."""
    sizes = [(128, input_size), (64, 128), (32, 64), (16, 32), (output_size, 16)]
    params = []
    for (out_f, in_f) in sizes:
        key, kw, kb = jax.random.split(key, 3)
        bound = 1.0 / jnp.sqrt(jnp.float32(in_f))
        w = jax.random.uniform(kw, (out_f, in_f), jnp.float32, -bound, bound)
        b = jax.random.uniform(kb, (out_f,), jnp.float32, -bound, bound)
        params.append((w, b))
    return params


def reference_forward(x, params):
    """Pure f32 reference matching the PyTorch module."""
    h = x
    for i, (w, b) in enumerate(params):
        h = h @ w.T + b
        if i < len(params) - 1:
            h = jnp.maximum(h, 0.0)
    return h


def reference_forward_mixed(x, params, dtype):
    """Mirrors the kernel's numerics: operands cast to `dtype`, f32 accumulation."""
    h = x
    for i, (w, b) in enumerate(params):
        w = jnp.asarray(w, dtype)
        h = jnp.dot(h.astype(dtype), w.T,
                    preferred_element_type=jnp.float32) + jnp.asarray(b, jnp.float32)
        if i < len(params) - 1:
            h = jnp.maximum(h, 0.0)
    return h


if __name__ == "__main__":
    key = jax.random.PRNGKey(0)
    input_size = 11   # typical snake-game state vector
    output_size = 3   # [straight, right, left]

    kx, kx2, kp = jax.random.split(key, 3)
    params = init_params(kp, input_size, output_size)

    # --- exactness check: f32 packing, single 128-lane tile (batch=8) ---
    x_small = jax.random.normal(kx, (8, input_size), jnp.float32)
    packed_f32 = pack_snakenet_params(params, dtype=jnp.float32)
    out_f32 = jax.block_until_ready(snakenet_forward(x_small, packed_f32))
    ref_f32 = reference_forward(x_small, params)
    assert out_f32.shape == (8, output_size)
    assert jnp.allclose(out_f32, ref_f32, atol=1e-5, rtol=1e-5), "f32 mismatch"

    # --- default bf16 packing, multi-tile grid (batch=384 -> tb=256, grid=2) ---
    x_big = jax.random.normal(kx2, (384, input_size), jnp.float32)
    packed = pack_snakenet_params(params)                 # bf16 weights (default)
    out_bf16 = jax.block_until_ready(snakenet_forward(x_big, packed))
    ref_mixed = reference_forward_mixed(x_big, params, jnp.bfloat16)
    ref_full = reference_forward(x_big, params)
    assert out_bf16.shape == (384, output_size)
    assert jnp.allclose(out_bf16, ref_mixed, atol=1e-2, rtol=1e-2), "bf16 mismatch"
    assert jnp.allclose(out_bf16, ref_full, atol=5e-2, rtol=5e-2), "bf16 drift"

    print("KERNEL_OK")
</pallas_src>

<mosaic_0001>
module attributes {stable_mosaic.version = 11 : i64} {
  func.func @snakenet_kernel(%arg0: i32, %arg1: memref<16x128xf32, #tpu.memory_space<vmem>>, %arg2: memref<128x16xf32, #tpu.memory_space<vmem>>, %arg3: memref<392x128xf32, #tpu.memory_space<vmem>>, %arg4: memref<128x8xf32, #tpu.memory_space<vmem>>, %arg5: memref<8x128xf32, #tpu.memory_space<vmem>>) attributes {dimension_semantics = [#tpu.dimension_semantics<parallel>], iteration_bounds = array<i64: 1>, scalar_prefetch = 0 : i64, scratch_operands = 0 : i64, tpu.core_type = #tpu.core_type<tc>, window_params = [{transform_indices = @transform_0, window_bounds = array<i64: 16, 128>}, {pipeline_mode = #tpu.pipeline_mode<synchronous>, transform_indices = @transform_1, window_bounds = array<i64: 128, 16>}, {pipeline_mode = #tpu.pipeline_mode<synchronous>, transform_indices = @transform_2, window_bounds = array<i64: 392, 128>}, {pipeline_mode = #tpu.pipeline_mode<synchronous>, transform_indices = @transform_3, window_bounds = array<i64: 128, 8>}, {transform_indices = @transform_4, window_bounds = array<i64: 8, 128>}]} {
    %c0 = arith.constant 0 : index
    %c0_0 = arith.constant 0 : index
    %0 = vector.load %arg2[%c0, %c0_0] : memref<128x16xf32, #tpu.memory_space<vmem>>, vector<128x16xf32>
    %c0_1 = arith.constant 0 : index
    %c0_2 = arith.constant 0 : index
    %1 = vector.load %arg1[%c0_1, %c0_2] : memref<16x128xf32, #tpu.memory_space<vmem>>, vector<16x128xf32>
    %cst = arith.constant dense<0.000000e+00> : vector<128x128xf32>
    %2 = tpu.matmul %0, %1, %cst {dimension_numbers = #tpu.dot_dimension_numbers<[1], [0], [0], [1], [0, 0, 1, 1], [], []>} : vector<128x16xf32>, vector<16x128xf32>, vector<128x128xf32> -> vector<128x128xf32>
    %c0_3 = arith.constant 0 : index
    %c0_4 = arith.constant 0 : index
    %3 = vector.load %arg4[%c0_3, %c0_4] : memref<128x8xf32, #tpu.memory_space<vmem>>, vector<128x1xf32>
    %4 = vector.broadcast %3 : vector<128x1xf32> to vector<128x128xf32>
    %5 = arith.addf %2, %4 : vector<128x128xf32>
    %cst_5 = arith.constant 0.000000e+00 : f32
    %6 = vector.broadcast %cst_5 : f32 to vector<128x128xf32>
    %7 = arith.maximumf %5, %6 : vector<128x128xf32>
    %c0_6 = arith.constant 0 : index
    %c0_7 = arith.constant 0 : index
    %8 = vector.load %arg3[%c0_6, %c0_7] : memref<392x128xf32, #tpu.memory_space<vmem>>, vector<128x128xf32>
    %cst_8 = arith.constant dense<0.000000e+00> : vector<128x128xf32>
    %9 = tpu.matmul %8, %7, %cst_8 {dimension_numbers = #tpu.dot_dimension_numbers<[1], [0], [0], [1], [0, 0, 1, 1], [], []>} : vector<128x128xf32>, vector<128x128xf32>, vector<128x128xf32> -> vector<128x128xf32>
    %c0_9 = arith.constant 0 : index
    %c1 = arith.constant 1 : index
    %10 = vector.load %arg4[%c0_9, %c1] : memref<128x8xf32, #tpu.memory_space<vmem>>, vector<128x1xf32>
    %11 = vector.broadcast %10 : vector<128x1xf32> to vector<128x128xf32>
    %12 = arith.addf %9, %11 : vector<128x128xf32>
    %cst_10 = arith.constant 0.000000e+00 : f32
    %13 = vector.broadcast %cst_10 : f32 to vector<128x128xf32>
    %14 = arith.maximumf %12, %13 : vector<128x128xf32>
    %c128 = arith.constant 128 : index
    %c0_11 = arith.constant 0 : index
    %15 = vector.load %arg3[%c128, %c0_11] : memref<392x128xf32, #tpu.memory_space<vmem>>, vector<128x128xf32>
    %cst_12 = arith.constant dense<0.000000e+00> : vector<128x128xf32>
    %16 = tpu.matmul %15, %14, %cst_12 {dimension_numbers = #tpu.dot_dimension_numbers<[1], [0], [0], [1], [0, 0, 1, 1], [], []>} : vector<128x128xf32>, vector<128x128xf32>, vector<128x128xf32> -> vector<128x128xf32>
    %c0_13 = arith.constant 0 : index
    %c2 = arith.constant 2 : index
    %17 = vector.load %arg4[%c0_13, %c2] : memref<128x8xf32, #tpu.memory_space<vmem>>, vector<128x1xf32>
    %18 = vector.broadcast %17 : vector<128x1xf32> to vector<128x128xf32>
    %19 = arith.addf %16, %18 : vector<128x128xf32>
    %cst_14 = arith.constant 0.000000e+00 : f32
    %20 = vector.broadcast %cst_14 : f32 to vector<128x128xf32>
    %21 = arith.maximumf %19, %20 : vector<128x128xf32>
    %c256 = arith.constant 256 : index
    %c0_15 = arith.constant 0 : index
    %22 = vector.load %arg3[%c256, %c0_15] : memref<392x128xf32, #tpu.memory_space<vmem>>, vector<128x128xf32>
    %cst_16 = arith.constant dense<0.000000e+00> : vector<128x128xf32>
    %23 = tpu.matmul %22, %21, %cst_16 {dimension_numbers = #tpu.dot_dimension_numbers<[1], [0], [0], [1], [0, 0, 1, 1], [], []>} : vector<128x128xf32>, vector<128x128xf32>, vector<128x128xf32> -> vector<128x128xf32>
    %c0_17 = arith.constant 0 : index
    %c3 = arith.constant 3 : index
    %24 = vector.load %arg4[%c0_17, %c3] : memref<128x8xf32, #tpu.memory_space<vmem>>, vector<128x1xf32>
    %25 = vector.broadcast %24 : vector<128x1xf32> to vector<128x128xf32>
    %26 = arith.addf %23, %25 : vector<128x128xf32>
    %cst_18 = arith.constant 0.000000e+00 : f32
    %27 = vector.broadcast %cst_18 : f32 to vector<128x128xf32>
    %28 = arith.maximumf %26, %27 : vector<128x128xf32>
    %c384 = arith.constant 384 : index
    %c0_19 = arith.constant 0 : index
    %29 = vector.load %arg3[%c384, %c0_19] : memref<392x128xf32, #tpu.memory_space<vmem>>, vector<8x128xf32>
    %cst_20 = arith.constant dense<0.000000e+00> : vector<8x128xf32>
    %30 = tpu.matmul %29, %28, %cst_20 {dimension_numbers = #tpu.dot_dimension_numbers<[1], [0], [0], [1], [0, 0, 1, 1], [], []>} : vector<8x128xf32>, vector<128x128xf32>, vector<8x128xf32> -> vector<8x128xf32>
    %c0_21 = arith.constant 0 : index
    %c4 = arith.constant 4 : index
    %31 = vector.load %arg4[%c0_21, %c4] : memref<128x8xf32, #tpu.memory_space<vmem>>, vector<8x1xf32>
    %32 = vector.broadcast %31 : vector<8x1xf32> to vector<8x128xf32>
    %33 = arith.addf %30, %32 : vector<8x128xf32>
    %c0_22 = arith.constant 0 : index
    %c0_23 = arith.constant 0 : index
    %34 = vector.load %arg5[%c0_22, %c0_23] : memref<8x128xf32, #tpu.memory_space<vmem>>, vector<8x128xf32>
    tpu.vector_store %arg5[%c0_22, %c0_23], %33 {strides = array<i32>} : memref<8x128xf32, #tpu.memory_space<vmem>>, vector<8x128xf32>,
    return
  }
  func.func @transform_0(%arg0: i32) -> (i32, i32) {
    %c0_i32 = arith.constant 0 : i32
    %c0_i32_0 = arith.constant 0 : i32
    return %c0_i32, %arg0 : i32, i32
  }
  func.func @transform_1(%arg0: i32) -> (i32, i32) {
    %c0_i32 = arith.constant 0 : i32
    %c0_i32_0 = arith.constant 0 : i32
    %c0_i32_1 = arith.constant 0 : i32
    return %c0_i32, %c0_i32_0 : i32, i32
  }
  func.func @transform_2(%arg0: i32) -> (i32, i32) {
    %c0_i32 = arith.constant 0 : i32
    %c0_i32_0 = arith.constant 0 : i32
    %c0_i32_1 = arith.constant 0 : i32
    return %c0_i32, %c0_i32_0 : i32, i32
  }
  func.func @transform_3(%arg0: i32) -> (i32, i32) {
    %c0_i32 = arith.constant 0 : i32
    %c0_i32_0 = arith.constant 0 : i32
    %c0_i32_1 = arith.constant 0 : i32
    return %c0_i32, %c0_i32_0 : i32, i32
  }
  func.func @transform_4(%arg0: i32) -> (i32, i32) {
    %c0_i32 = arith.constant 0 : i32
    %c0_i32_0 = arith.constant 0 : i32
    return %c0_i32, %arg0 : i32, i32
  }
}

</mosaic_0001>

<llo_original>
// kernel: tpu_custom_call.1
$region0: #{tpu_custom_call.1}
  #allocation0 [shape = 'u32[]', space=smem, size = 0x4, offset = 0x4, fixed_abs, tag = 'smem constant byte address 0x4 - core index']
  #allocation1 [shape = 'u32[144,128]{1,0:T(1,128)}', space=vmem, size = 0x12000, scoped, tag = 'internal scratch']
  %s0 = inlined_call_operand.vmem [shape: f32[16,128], index: 0, kind: input, shape index: {}]
  %s1 = inlined_call_operand.vmem [shape: f32[128,16], index: 1, kind: input, shape index: {}]
  %s2 = inlined_call_operand.hbm [shape: f32[392,128], index: 2, kind: input, shape index: {}]
  %s3 = inlined_call_operand.vmem [shape: f32[128,8], index: 3, kind: input, shape index: {}]
  %s4 = inlined_call_operand.hbm [shape: f32[8,128], index: 4, kind: output, shape index: {}]
  %s5 = sld [smem:[#allocation0]]
  $region30: #{tpu_custom_call.1} parent=0
    _
  %s7 = ssub.s32 1, %s5
  %s8 = scalar_select 0, %s7, %s5
  $region1: #{tpu_custom_call.1} parent=0
    #allocation2 [shape = 'u8[200704]{0}', space=vmem, size = 0x31000, scoped, tag = 'input window, operand 2, single buffered']
    #allocation3 [shape = 's32[1]{0}', space=sflag, size = 0x4, scoped, tag = 'scoped memory for tpu_custom_call.1']
    #allocation4 [shape = 's32[1]{0}', space=sflag, size = 0x4, scoped, tag = 'scoped memory for tpu_custom_call.1']
    #allocation5 [shape = 'u8[4096]{0}', space=vmem, size = 0x1000, scoped, tag = 'output window, operand 0, single buffered']
    %9 = vsyncpa [#allocation3], 0
    %10 = vsyncpa [#allocation4], 0
    // Predicated region
    $region2: #{tpu_custom_call.1} parent=1 // pred_check
      _
    $region3: #{tpu_custom_call.1} parent=1 // pred_check_branch
      %12 = sbr.rel (0) target = $region5
    $region4: #{tpu_custom_call.1} parent=1 // pred_region
      _
    $region5: #{tpu_custom_call.1} parent=1 // pred_fallthru
      _
    // Predicated region
    $region6: #{tpu_custom_call.1} parent=1 // pred_check
      _
    $region7: #{tpu_custom_call.1} parent=1 // pred_check_branch
      %14 = sbr.rel (0) target = $region9
    $region8: #{tpu_custom_call.1} parent=1 // pred_region
      _
    $region9: #{tpu_custom_call.1} parent=1 // pred_fallthru
      _
    // Predicated region
    $region10: #{tpu_custom_call.1} parent=1 // pred_check
      _
    $region11: #{tpu_custom_call.1} parent=1 // pred_check_branch
      %16 = sbr.rel (0) target = $region13
    $region12: #{tpu_custom_call.1} parent=1 // pred_region
      %s18 = ssub.s32 6272, 6272
      %19 = vsyncadd [#allocation3], %s18
      %s20 = sshll.u32 [#allocation2], 4
      %s21 = int_to_ptr.vmem [resolvable:$true] %s20
      %26 = dma.hbm_to_vmem [thread:$0]  %s2, 6272, %s21, [#allocation3], 128, 128, 8
    $region13: #{tpu_custom_call.1} parent=1 // pred_fallthru
      _
    // Predicated region
    $region14: #{tpu_custom_call.1} parent=1 // pred_check
      _
    $region15: #{tpu_custom_call.1} parent=1 // pred_check_branch
      %28 = sbr.rel (0) target = $region17
    $region16: #{tpu_custom_call.1} parent=1 // pred_region
      _
    $region17: #{tpu_custom_call.1} parent=1 // pred_fallthru
      _
    // Predicated region
    $region18: #{tpu_custom_call.1} parent=1 // pred_check
      _
    $region19: #{tpu_custom_call.1} parent=1 // pred_check_branch
      %30 = sbr.rel (0) target = $region21
    $region20: #{tpu_custom_call.1} parent=1 // pred_region
      %31 = dma.done [#allocation3], 6272
    $region21: #{tpu_custom_call.1} parent=1 // pred_fallthru
      _
    %v32 = vld [vmem:[%s1] sm:$0xff]
    %v33 = vld [vmem:[%s1 + $0x8] sm:$0xff]
    %v34 = vld [vmem:[%s1 + $0x10] sm:$0xff]
    %v35 = vld [vmem:[%s1 + $0x18] sm:$0xff]
    %v36 = vld [vmem:[%s1 + $0x20] sm:$0xff]
    %v37 = vld [vmem:[%s1 + $0x28] sm:$0xff]
    %v38 = vld [vmem:[%s1 + $0x30] sm:$0xff]
    %v39 = vld [vmem:[%s1 + $0x38] sm:$0xff]
    %v40 = vld [vmem:[%s1 + $0x40] sm:$0xff]
    %v41 = vld [vmem:[%s1 + $0x48] sm:$0xff]
    %v42 = vld [vmem:[%s1 + $0x50] sm:$0xff]
    %v43 = vld [vmem:[%s1 + $0x58] sm:$0xff]
    %v44 = vld [vmem:[%s1 + $0x60] sm:$0xff]
    %v45 = vld [vmem:[%s1 + $0x68] sm:$0xff]
    %v46 = vld [vmem:[%s1 + $0x70] sm:$0xff]
    %v47 = vld [vmem:[%s1 + $0x78] sm:$0xff]
    %v48 = vld [vmem:[%s0] sm:$0xff]
    %v49 = vld [vmem:[%s0 + $0x8] sm:$0xff]
    %v50 = vld [vmem:[%s3] sm:$0xff]
    %v51 = vld [vmem:[%s3 + $0x8] sm:$0xff]
    %v52 = vld [vmem:[%s3 + $0x10] sm:$0xff]
    %v53 = vld [vmem:[%s3 + $0x18] sm:$0xff]
    %v54 = vld [vmem:[%s3 + $0x20] sm:$0xff]
    %v55 = vld [vmem:[%s3 + $0x28] sm:$0xff]
    %v56 = vld [vmem:[%s3 + $0x30] sm:$0xff]
    %v57 = vld [vmem:[%s3 + $0x38] sm:$0xff]
    %v58 = vld [vmem:[%s3 + $0x40] sm:$0xff]
    %v59 = vld [vmem:[%s3 + $0x48] sm:$0xff]
    %v60 = vld [vmem:[%s3 + $0x50] sm:$0xff]
    %v61 = vld [vmem:[%s3 + $0x58] sm:$0xff]
    %v62 = vld [vmem:[%s3 + $0x60] sm:$0xff]
    %v63 = vld [vmem:[%s3 + $0x68] sm:$0xff]
    %v64 = vld [vmem:[%s3 + $0x70] sm:$0xff]
    %v65 = vld [vmem:[%s3 + $0x78] sm:$0xff]
    %67 = vset.pattern.permute.xlu0 0
    %68 = vperm.xlu0 %67, %v50
    %v69 = vpop.permute.xlu0 %68
    %72 = vset.pattern.permute.xlu0 0
    %73 = vperm.xlu0 %72, %v51
    %v74 = vpop.permute.xlu0 %73
    %77 = vset.pattern.permute.xlu0 0
    %78 = vperm.xlu0 %77, %v52
    %v79 = vpop.permute.xlu0 %78
    %82 = vset.pattern.permute.xlu0 0
    %83 = vperm.xlu0 %82, %v53
    %v84 = vpop.permute.xlu0 %83
    %87 = vset.pattern.permute.xlu0 0
    %88 = vperm.xlu0 %87, %v54
    %v89 = vpop.permute.xlu0 %88
    %92 = vset.pattern.permute.xlu0 0
    %93 = vperm.xlu0 %92, %v55
    %v94 = vpop.permute.xlu0 %93
    %97 = vset.pattern.permute.xlu0 0
    %98 = vperm.xlu0 %97, %v56
    %v99 = vpop.permute.xlu0 %98
    %102 = vset.pattern.permute.xlu0 0
    %103 = vperm.xlu0 %102, %v57
    %v104 = vpop.permute.xlu0 %103
    %107 = vset.pattern.permute.xlu0 0
    %108 = vperm.xlu0 %107, %v58
    %v109 = vpop.permute.xlu0 %108
    %112 = vset.pattern.permute.xlu0 0
    %113 = vperm.xlu0 %112, %v59
    %v114 = vpop.permute.xlu0 %113
    %117 = vset.pattern.permute.xlu0 0
    %118 = vperm.xlu0 %117, %v60
    %v119 = vpop.permute.xlu0 %118
    %122 = vset.pattern.permute.xlu0 0
    %123 = vperm.xlu0 %122, %v61
    %v124 = vpop.permute.xlu0 %123
    %127 = vset.pattern.permute.xlu0 0
    %128 = vperm.xlu0 %127, %v62
    %v129 = vpop.permute.xlu0 %128
    %132 = vset.pattern.permute.xlu0 0
    %133 = vperm.xlu0 %132, %v63
    %v134 = vpop.permute.xlu0 %133
    %137 = vset.pattern.permute.xlu0 0
    %138 = vperm.xlu0 %137, %v64
    %v139 = vpop.permute.xlu0 %138
    %142 = vset.pattern.permute.xlu0 0
    %143 = vperm.xlu0 %142, %v65
    %v144 = vpop.permute.xlu0 %143
    %vm146 = vcmask 130048
    %v148 = vsel %vm146, %v32, 0
    %v151 = vsel %vm146, %v33, 0
    %v154 = vsel %vm146, %v34, 0
    %v157 = vsel %vm146, %v35, 0
    %v160 = vsel %vm146, %v36, 0
    %v163 = vsel %vm146, %v37, 0
    %v166 = vsel %vm146, %v38, 0
    %v169 = vsel %vm146, %v39, 0
    %v172 = vsel %vm146, %v40, 0
    %v175 = vsel %vm146, %v41, 0
    %v178 = vsel %vm146, %v42, 0
    %v181 = vsel %vm146, %v43, 0
    %v184 = vsel %vm146, %v44, 0
    %v187 = vsel %vm146, %v45, 0
    %v190 = vsel %vm146, %v46, 0
    %v193 = vsel %vm146, %v47, 0
    %195 = vmatprep.subr.mxu0 0.0
    %196 = vmatpush1.msra.mxu0 %v48
    %197 = vmatprep.subr.mxu0 0.0
    %198 = vmatpush1.msra.mxu0 %v49
    %199 = vmatprep.subr.mxu0 0.0
    %200 = vmatpush1.msra.mxu0 0.0
    %201 = vmatprep.subr.mxu0 0.0
    %202 = vmatpush1.msra.mxu0 0.0
    %203 = vmatprep.subr.mxu0 0.0
    %204 = vmatpush1.msra.mxu0 0.0
    %205 = vmatprep.subr.mxu0 0.0
    %206 = vmatpush1.msra.mxu0 0.0
    %207 = vmatprep.subr.mxu0 0.0
    %208 = vmatpush1.msra.mxu0 0.0
    %209 = vmatprep.subr.mxu0 0.0
    %210 = vmatpush1.msra.mxu0 0.0
    %211 = vmatprep.subr.mxu0 0.0
    %212 = vmatpush1.msra.mxu0 0.0
    %213 = vmatprep.subr.mxu0 0.0
    %214 = vmatpush1.msra.mxu0 0.0
    %215 = vmatprep.subr.mxu0 0.0
    %216 = vmatpush1.msra.mxu0 0.0
    %217 = vmatprep.subr.mxu0 0.0
    %218 = vmatpush1.msra.mxu0 0.0
    %219 = vmatprep.subr.mxu0 0.0
    %220 = vmatpush1.msra.mxu0 0.0
    %221 = vmatprep.subr.mxu0 0.0
    %222 = vmatpush1.msra.mxu0 0.0
    %223 = vmatprep.subr.mxu0 0.0
    %224 = vmatpush1.msra.mxu0 0.0
    %225 = vmatprep.subr.mxu0 0.0
    %226 = vmatpush1.msra.mxu0 0.0
    %227 = vmatprep.subr.mxu0 0.0
    %228 = vmatpush1.msra.mxu0 0.0
    %229 = vmatprep.subr.mxu0 0.0
    %230 = vmatpush1.msra.mxu0 0.0
    %231 = vmatprep.subr.mxu0 0.0
    %232 = vmatpush1.msra.mxu0 0.0
    %233 = vmatprep.subr.mxu0 0.0
    %234 = vmatpush1.msra.mxu0 0.0
    %235 = vmatprep.subr.mxu0 0.0
    %236 = vmatpush1.msra.mxu0 0.0
    %237 = vmatprep.subr.mxu0 0.0
    %238 = vmatpush1.msra.mxu0 0.0
    %239 = vmatprep.subr.mxu0 0.0
    %240 = vmatpush1.msra.mxu0 0.0
    %241 = vmatprep.subr.mxu0 0.0
    %242 = vmatpush1.msra.mxu0 0.0
    %243 = vmatprep.subr.mxu0 0.0
    %244 = vmatpush1.msra.mxu0 0.0
    %245 = vmatprep.subr.mxu0 0.0
    %246 = vmatpush1.msra.mxu0 0.0
    %247 = vmatprep.subr.mxu0 0.0
    %248 = vmatpush1.msra.mxu0 0.0
    %249 = vmatprep.subr.mxu0 0.0
    %250 = vmatpush1.msra.mxu0 0.0
    %251 = vmatprep.subr.mxu0 0.0
    %252 = vmatpush1.msra.mxu0 0.0
    %253 = vmatprep.subr.mxu0 0.0
    %254 = vmatpush1.msra.mxu0 0.0
    %255 = vmatprep.subr.mxu0 0.0
    %256 = vmatpush1.msra.mxu0 0.0
    %257 = vmatprep.subr.mxu0 0.0
    %258 = vmatpush1.msra.mxu0 0.0
    %259 = vmatprep.mubr.f32.mxu0 0.0
    %260 = vmatmul.mubr.f32.gmra.mrb[0].mxu0 %v148
    %v261 = vpop.f32.mrb[0].mxu0
    %v262 = vadd.f32 %v69, %v261
    %v263 = vpop.f32.mrb[0].mxu0
    %264 = vmatprep.mubr.f32.mxu0 0.0
    %265 = vmatmul.mubr.f32.gmra.mrb[0].mxu0 %v151
    %v266 = vpop.f32.mrb[0].mxu0
    %v267 = vadd.f32 %v74, %v266
    %v268 = vpop.f32.mrb[0].mxu0
    %269 = vmatprep.mubr.f32.mxu0 0.0
    %270 = vmatmul.mubr.f32.gmra.mrb[0].mxu0 %v154
    %v271 = vpop.f32.mrb[0].mxu0
    %v272 = vadd.f32 %v79, %v271
    %v273 = vpop.f32.mrb[0].mxu0
    %274 = vmatprep.mubr.f32.mxu0 0.0
    %275 = vmatmul.mubr.f32.gmra.mrb[0].mxu0 %v157
    %v276 = vpop.f32.mrb[0].mxu0
    %v277 = vadd.f32 %v84, %v276
    %v278 = vpop.f32.mrb[0].mxu0
    %279 = vmatprep.mubr.f32.mxu0 0.0
    %280 = vmatmul.mubr.f32.gmra.mrb[0].mxu0 %v160
    %v281 = vpop.f32.mrb[0].mxu0
    %v282 = vadd.f32 %v89, %v281
    %v283 = vpop.f32.mrb[0].mxu0
    %284 = vmatprep.mubr.f32.mxu0 0.0
    %285 = vmatmul.mubr.f32.gmra.mrb[0].mxu0 %v163
    %v286 = vpop.f32.mrb[0].mxu0
    %v287 = vadd.f32 %v94, %v286
    %v288 = vpop.f32.mrb[0].mxu0
    %289 = vmatprep.mubr.f32.mxu0 0.0
    %290 = vmatmul.mubr.f32.gmra.mrb[0].mxu0 %v166
    %v291 = vpop.f32.mrb[0].mxu0
    %v292 = vadd.f32 %v99, %v291
    %v293 = vpop.f32.mrb[0].mxu0
    %294 = vmatprep.mubr.f32.mxu0 0.0
    %295 = vmatmul.mubr.f32.gmra.mrb[0].mxu0 %v169
    %v296 = vpop.f32.mrb[0].mxu0
    %v297 = vadd.f32 %v104, %v296
    %v298 = vpop.f32.mrb[0].mxu0
    %299 = vmatprep.mubr.f32.mxu0 0.0
    %300 = vmatmul.mubr.f32.gmra.mrb[0].mxu0 %v172
    %v301 = vpop.f32.mrb[0].mxu0
    %v302 = vadd.f32 %v109, %v301
    %v303 = vpop.f32.mrb[0].mxu0
    %304 = vmatprep.mubr.f32.mxu0 0.0
    %305 = vmatmul.mubr.f32.gmra.mrb[0].mxu0 %v175
    %v306 = vpop.f32.mrb[0].mxu0
    %v307 = vadd.f32 %v114, %v306
    %v308 = vpop.f32.mrb[0].mxu0
    %309 = vmatprep.mubr.f32.mxu0 0.0
    %310 = vmatmul.mubr.f32.gmra.mrb[0].mxu0 %v178
    %v311 = vpop.f32.mrb[0].mxu0
    %v312 = vadd.f32 %v119, %v311
    %v313 = vpop.f32.mrb[0].mxu0
    %314 = vmatprep.mubr.f32.mxu0 0.0
    %315 = vmatmul.mubr.f32.gmra.mrb[0].mxu0 %v181
    %v316 = vpop.f32.mrb[0].mxu0
    %v317 = vadd.f32 %v124, %v316
    %v318 = vpop.f32.mrb[0].mxu0
    %319 = vmatprep.mubr.f32.mxu0 0.0
    %320 = vmatmul.mubr.f32.gmra.mrb[0].mxu0 %v184
    %v321 = vpop.f32.mrb[0].mxu0
    %v322 = vadd.f32 %v129, %v321
    %v323 = vpop.f32.mrb[0].mxu0
    %324 = vmatprep.mubr.f32.mxu0 0.0
    %325 = vmatmul.mubr.f32.gmra.mrb[0].mxu0 %v187
    %v326 = vpop.f32.mrb[0].mxu0
    %v327 = vadd.f32 %v134, %v326
    %v328 = vpop.f32.mrb[0].mxu0
    %329 = vmatprep.mubr.f32.mxu0 0.0
    %330 = vmatmul.mubr.f32.gmra.mrb[0].mxu0 %v190
    %v331 = vpop.f32.mrb[0].mxu0
    %v332 = vadd.f32 %v139, %v331
    %v333 = vpop.f32.mrb[0].mxu0
    %334 = vmatprep.mubr.f32.mxu0 0.0
    %335 = vmatmul.mubr.f32.gmra.mrb[0].mxu0 %v193
    %v336 = vpop.f32.mrb[0].mxu0
    %v337 = vadd.f32 %v144, %v336
    %v338 = vpop.f32.mrb[0].mxu0
    %339 = vdwg.mxu0
    %v340 = vmax.f32 %v262, 0.0
    %v341 = vmax.f32 %v267, 0.0
    %v342 = vmax.f32 %v272, 0.0
    %v343 = vmax.f32 %v277, 0.0
    %v344 = vmax.f32 %v282, 0.0
    %v345 = vmax.f32 %v287, 0.0
    %v346 = vmax.f32 %v292, 0.0
    %v347 = vmax.f32 %v297, 0.0
    %v348 = vmax.f32 %v302, 0.0
    %v349 = vmax.f32 %v307, 0.0
    %v350 = vmax.f32 %v312, 0.0
    %v351 = vmax.f32 %v317, 0.0
    %v352 = vmax.f32 %v322, 0.0
    %v353 = vmax.f32 %v327, 0.0
    %v354 = vmax.f32 %v332, 0.0
    %v355 = vmax.f32 %v337, 0.0
    %v356 = vld [vmem:[#allocation2] sm:$0xff]
    %v357 = vld [vmem:[#allocation2 + $0x8] sm:$0xff]
    %v358 = vld [vmem:[#allocation2 + $0x10] sm:$0xff]
    %v359 = vld [vmem:[#allocation2 + $0x18] sm:$0xff]
    %v360 = vld [vmem:[#allocation2 + $0x20] sm:$0xff]
    %v361 = vld [vmem:[#allocation2 + $0x28] sm:$0xff]
    %v362 = vld [vmem:[#allocation2 + $0x30] sm:$0xff]
    %v363 = vld [vmem:[#allocation2 + $0x38] sm:$0xff]
    %v364 = vld [vmem:[#allocation2 + $0x40] sm:$0xff]
    %v365 = vld [vmem:[#allocation2 + $0x48] sm:$0xff]
    %v366 = vld [vmem:[#allocation2 + $0x50] sm:$0xff]
    %v367 = vld [vmem:[#allocation2 + $0x58] sm:$0xff]
    %v368 = vld [vmem:[#allocation2 + $0x60] sm:$0xff]
    %v369 = vld [vmem:[#allocation2 + $0x68] sm:$0xff]
    %v370 = vld [vmem:[#allocation2 + $0x70] sm:$0xff]
    %v371 = vld [vmem:[#allocation2 + $0x78] sm:$0xff]
    %372 = vset.pattern.permute.xlu0 1
    %373 = vperm.xlu0 %372, %v50
    %v374 = vpop.permute.xlu0 %373
    %376 = vset.pattern.permute.xlu0 1
    %377 = vperm.xlu0 %376, %v51
    %v378 = vpop.permute.xlu0 %377
    %380 = vset.pattern.permute.xlu0 1
    %381 = vperm.xlu0 %380, %v52
    %v382 = vpop.permute.xlu0 %381
    %384 = vset.pattern.permute.xlu0 1
    %385 = vperm.xlu0 %384, %v53
    %v386 = vpop.permute.xlu0 %385
    %388 = vset.pattern.permute.xlu0 1
    %389 = vperm.xlu0 %388, %v54
    %v390 = vpop.permute.xlu0 %389
    %392 = vset.pattern.permute.xlu0 1
    %393 = vperm.xlu0 %392, %v55
    %v394 = vpop.permute.xlu0 %393
    %396 = vset.pattern.permute.xlu0 1
    %397 = vperm.xlu0 %396, %v56
    %v398 = vpop.permute.xlu0 %397
    %400 = vset.pattern.permute.xlu0 1
    %401 = vperm.xlu0 %400, %v57
    %v402 = vpop.permute.xlu0 %401
    %404 = vset.pattern.permute.xlu0 1
    %405 = vperm.xlu0 %404, %v58
    %v406 = vpop.permute.xlu0 %405
    %408 = vset.pattern.permute.xlu0 1
    %409 = vperm.xlu0 %408, %v59
    %v410 = vpop.permute.xlu0 %409
    %412 = vset.pattern.permute.xlu0 1
    %413 = vperm.xlu0 %412, %v60
    %v414 = vpop.permute.xlu0 %413
    %416 = vset.pattern.permute.xlu0 1
    %417 = vperm.xlu0 %416, %v61
    %v418 = vpop.permute.xlu0 %417
    %420 = vset.pattern.permute.xlu0 1
    %421 = vperm.xlu0 %420, %v62
    %v422 = vpop.permute.xlu0 %421
    %424 = vset.pattern.permute.xlu0 1
    %425 = vperm.xlu0 %424, %v63
    %v426 = vpop.permute.xlu0 %425
    %428 = vset.pattern.permute.xlu0 1
    %429 = vperm.xlu0 %428, %v64
    %v430 = vpop.permute.xlu0 %429
    %432 = vset.pattern.permute.xlu0 1
    %433 = vperm.xlu0 %432, %v65
    %v434 = vpop.permute.xlu0 %433
    %436 = vmatprep.subr.mxu0 0.0
    %437 = vmatpush1.msra.mxu0 %v340
    %438 = vmatprep.subr.mxu0 0.0
    %439 = vmatpush1.msra.mxu0 %v341
    %440 = vmatprep.subr.mxu0 0.0
    %441 = vmatpush1.msra.mxu0 %v342
    %442 = vmatprep.subr.mxu0 0.0
    %443 = vmatpush1.msra.mxu0 %v343
    %444 = vmatprep.subr.mxu0 0.0
    %445 = vmatpush1.msra.mxu0 %v344
    %446 = vmatprep.subr.mxu0 0.0
    %447 = vmatpush1.msra.mxu0 %v345
    %448 = vmatprep.subr.mxu0 0.0
    %449 = vmatpush1.msra.mxu0 %v346
    %450 = vmatprep.subr.mxu0 0.0
    %451 = vmatpush1.msra.mxu0 %v347
    %452 = vmatprep.subr.mxu0 0.0
    %453 = vmatpush1.msra.mxu0 %v348
    %454 = vmatprep.subr.mxu0 0.0
    %455 = vmatpush1.msra.mxu0 %v349
    %456 = vmatprep.subr.mxu0 0.0
    %457 = vmatpush1.msra.mxu0 %v350
    %458 = vmatprep.subr.mxu0 0.0
    %459 = vmatpush1.msra.mxu0 %v351
    %460 = vmatprep.subr.mxu0 0.0
    %461 = vmatpush1.msra.mxu0 %v352
    %462 = vmatprep.subr.mxu0 0.0
    %463 = vmatpush1.msra.mxu0 %v353
    %464 = vmatprep.subr.mxu0 0.0
    %465 = vmatpush1.msra.mxu0 %v354
    %466 = vmatprep.subr.mxu0 0.0
    %467 = vmatpush1.msra.mxu0 %v355
    %468 = vmatprep.subr.mxu0 0.0
    %469 = vmatpush1.msra.mxu0 0.0
    %470 = vmatprep.subr.mxu0 0.0
    %471 = vmatpush1.msra.mxu0 0.0
    %472 = vmatprep.subr.mxu0 0.0
    %473 = vmatpush1.msra.mxu0 0.0
    %474 = vmatprep.subr.mxu0 0.0
    %475 = vmatpush1.msra.mxu0 0.0
    %476 = vmatprep.subr.mxu0 0.0
    %477 = vmatpush1.msra.mxu0 0.0
    %478 = vmatprep.subr.mxu0 0.0
    %479 = vmatpush1.msra.mxu0 0.0
    %480 = vmatprep.subr.mxu0 0.0
    %481 = vmatpush1.msra.mxu0 0.0
    %482 = vmatprep.subr.mxu0 0.0
    %483 = vmatpush1.msra.mxu0 0.0
    %484 = vmatprep.subr.mxu0 0.0
    %485 = vmatpush1.msra.mxu0 0.0
    %486 = vmatprep.subr.mxu0 0.0
    %487 = vmatpush1.msra.mxu0 0.0
    %488 = vmatprep.subr.mxu0 0.0
    %489 = vmatpush1.msra.mxu0 0.0
    %490 = vmatprep.subr.mxu0 0.0
    %491 = vmatpush1.msra.mxu0 0.0
    %492 = vmatprep.subr.mxu0 0.0
    %493 = vmatpush1.msra.mxu0 0.0
    %494 = vmatprep.subr.mxu0 0.0
    %495 = vmatpush1.msra.mxu0 0.0
    %496 = vmatprep.subr.mxu0 0.0
    %497 = vmatpush1.msra.mxu0 0.0
    %498 = vmatprep.subr.mxu0 0.0
    %499 = vmatpush1.msra.mxu0 0.0
    %500 = vmatprep.mubr.f32.mxu0 0.0
    %501 = vmatmul.mubr.f32.gmra.mrb[0].mxu0 %v356
    %v502 = vpop.f32.mrb[0].mxu0
    %v503 = vadd.f32 %v374, %v502
    %v504 = vpop.f32.mrb[0].mxu0
    %505 = vmatprep.mubr.f32.mxu0 0.0
    %506 = vmatmul.mubr.f32.gmra.mrb[0].mxu0 %v357
    %v507 = vpop.f32.mrb[0].mxu0
    %v508 = vadd.f32 %v378, %v507
    %v509 = vpop.f32.mrb[0].mxu0
    %510 = vmatprep.mubr.f32.mxu0 0.0
    %511 = vmatmul.mubr.f32.gmra.mrb[0].mxu0 %v358
    %v512 = vpop.f32.mrb[0].mxu0
    %v513 = vadd.f32 %v382, %v512
    %v514 = vpop.f32.mrb[0].mxu0
    %515 = vmatprep.mubr.f32.mxu0 0.0
    %516 = vmatmul.mubr.f32.gmra.mrb[0].mxu0 %v359
    %v517 = vpop.f32.mrb[0].mxu0
    %v518 = vadd.f32 %v386, %v517
    %v519 = vpop.f32.mrb[0].mxu0
    %520 = vmatprep.mubr.f32.mxu0 0.0
    %521 = vmatmul.mubr.f32.gmra.mrb[0].mxu0 %v360
    %v522 = vpop.f32.mrb[0].mxu0
    %v523 = vadd.f32 %v390, %v522
    %v524 = vpop.f32.mrb[0].mxu0
    %525 = vmatprep.mubr.f32.mxu0 0.0
    %526 = vmatmul.mubr.f32.gmra.mrb[0].mxu0 %v361
    %v527 = vpop.f32.mrb[0].mxu0
    %v528 = vadd.f32 %v394, %v527
    %v529 = vpop.f32.mrb[0].mxu0
    %530 = vmatprep.mubr.f32.mxu0 0.0
    %531 = vmatmul.mubr.f32.gmra.mrb[0].mxu0 %v362
    %v532 = vpop.f32.mrb[0].mxu0
    %v533 = vadd.f32 %v398, %v532
    %v534 = vpop.f32.mrb[0].mxu0
    %535 = vmatprep.mubr.f32.mxu0 0.0
    %536 = vmatmul.mubr.f32.gmra.mrb[0].mxu0 %v363
    %v537 = vpop.f32.mrb[0].mxu0
    %v538 = vadd.f32 %v402, %v537
    %v539 = vpop.f32.mrb[0].mxu0
    %540 = vmatprep.mubr.f32.mxu0 0.0
    %541 = vmatmul.mubr.f32.gmra.mrb[0].mxu0 %v364
    %v542 = vpop.f32.mrb[0].mxu0
    %v543 = vadd.f32 %v406, %v542
    %v544 = vpop.f32.mrb[0].mxu0
    %545 = vmatprep.mubr.f32.mxu0 0.0
    %546 = vmatmul.mubr.f32.gmra.mrb[0].mxu0 %v365
    %v547 = vpop.f32.mrb[0].mxu0
    %v548 = vadd.f32 %v410, %v547
    %v549 = vpop.f32.mrb[0].mxu0
    %550 = vmatprep.mubr.f32.mxu0 0.0
    %551 = vmatmul.mubr.f32.gmra.mrb[0].mxu0 %v366
    %v552 = vpop.f32.mrb[0].mxu0
    %v553 = vadd.f32 %v414, %v552
    %v554 = vpop.f32.mrb[0].mxu0
    %555 = vmatprep.mubr.f32.mxu0 0.0
    %556 = vmatmul.mubr.f32.gmra.mrb[0].mxu0 %v367
    %v557 = vpop.f32.mrb[0].mxu0
    %v558 = vadd.f32 %v418, %v557
    %v559 = vpop.f32.mrb[0].mxu0
    %560 = vmatprep.mubr.f32.mxu0 0.0
    %561 = vmatmul.mubr.f32.gmra.mrb[0].mxu0 %v368
    %v562 = vpop.f32.mrb[0].mxu0
    %v563 = vadd.f32 %v422, %v562
    %v564 = vpop.f32.mrb[0].mxu0
    %565 = vmatprep.mubr.f32.mxu0 0.0
    %566 = vmatmul.mubr.f32.gmra.mrb[0].mxu0 %v369
    %v567 = vpop.f32.mrb[0].mxu0
    %v568 = vadd.f32 %v426, %v567
    %v569 = vpop.f32.mrb[0].mxu0
    %570 = vmatprep.mubr.f32.mxu0 0.0
    %571 = vmatmul.mubr.f32.gmra.mrb[0].mxu0 %v370
    %v572 = vpop.f32.mrb[0].mxu0
    %v573 = vadd.f32 %v430, %v572
    %v574 = vpop.f32.mrb[0].mxu0
    %575 = vmatprep.mubr.f32.mxu0 0.0
    %576 = vmatmul.mubr.f32.gmra.mrb[0].mxu0 %v371
    %v577 = vpop.f32.mrb[0].mxu0
    %v578 = vadd.f32 %v434, %v577
    %v579 = vpop.f32.mrb[0].mxu0
    %580 = vdwg.mxu0
    %v581 = vmax.f32 %v503, 0.0
    %v582 = vmax.f32 %v508, 0.0
    %v583 = vmax.f32 %v513, 0.0
    %v584 = vmax.f32 %v518, 0.0
    %v585 = vmax.f32 %v523, 0.0
    %v586 = vmax.f32 %v528, 0.0
    %v587 = vmax.f32 %v533, 0.0
    %v588 = vmax.f32 %v538, 0.0
    %v589 = vmax.f32 %v543, 0.0
    %v590 = vmax.f32 %v548, 0.0
    %v591 = vmax.f32 %v553, 0.0
    %v592 = vmax.f32 %v558, 0.0
    %v593 = vmax.f32 %v563, 0.0
    %v594 = vmax.f32 %v568, 0.0
    %v595 = vmax.f32 %v573, 0.0
    %v596 = vmax.f32 %v578, 0.0
    %v597 = vld [vmem:[#allocation2 + $0x80] sm:$0xff]
    %v598 = vld [vmem:[#allocation2 + $0x88] sm:$0xff]
    %v599 = vld [vmem:[#allocation2 + $0x90] sm:$0xff]
    %v600 = vld [vmem:[#allocation2 + $0x98] sm:$0xff]
    %v601 = vld [vmem:[#allocation2 + $0xa0] sm:$0xff]
    %v602 = vld [vmem:[#allocation2 + $0xa8] sm:$0xff]
    %v603 = vld [vmem:[#allocation2 + $0xb0] sm:$0xff]
    %v604 = vld [vmem:[#allocation2 + $0xb8] sm:$0xff]
    %v605 = vld [vmem:[#allocation2 + $0xc0] sm:$0xff]
    %v606 = vld [vmem:[#allocation2 + $0xc8] sm:$0xff]
    %v607 = vld [vmem:[#allocation2 + $0xd0] sm:$0xff]
    %v608 = vld [vmem:[#allocation2 + $0xd8] sm:$0xff]
    %v609 = vld [vmem:[#allocation2 + $0xe0] sm:$0xff]
    %v610 = vld [vmem:[#allocation2 + $0xe8] sm:$0xff]
    %v611 = vld [vmem:[#allocation2 + $0xf0] sm:$0xff]
    %v612 = vld [vmem:[#allocation2 + $0xf8] sm:$0xff]
    %613 = vset.pattern.permute.xlu0 2
    %614 = vperm.xlu0 %613, %v50
    %v615 = vpop.permute.xlu0 %614
    %617 = vset.pattern.permute.xlu0 2
    %618 = vperm.xlu0 %617, %v51
    %v619 = vpop.permute.xlu0 %618
    %621 = vset.pattern.permute.xlu0 2
    %622 = vperm.xlu0 %621, %v52
    %v623 = vpop.permute.xlu0 %622
    %625 = vset.pattern.permute.xlu0 2
    %626 = vperm.xlu0 %625, %v53
    %v627 = vpop.permute.xlu0 %626
    %629 = vset.pattern.permute.xlu0 2
    %630 = vperm.xlu0 %629, %v54
    %v631 = vpop.permute.xlu0 %630
    %633 = vset.pattern.permute.xlu0 2
    %634 = vperm.xlu0 %633, %v55
    %v635 = vpop.permute.xlu0 %634
    %637 = vset.pattern.permute.xlu0 2
    %638 = vperm.xlu0 %637, %v56
    %v639 = vpop.permute.xlu0 %638
    %641 = vset.pattern.permute.xlu0 2
    %642 = vperm.xlu0 %641, %v57
    %v643 = vpop.permute.xlu0 %642
    %645 = vset.pattern.permute.xlu0 2
    %646 = vperm.xlu0 %645, %v58
    %v647 = vpop.permute.xlu0 %646
    %649 = vset.pattern.permute.xlu0 2
    %650 = vperm.xlu0 %649, %v59
    %v651 = vpop.permute.xlu0 %650
    %653 = vset.pattern.permute.xlu0 2
    %654 = vperm.xlu0 %653, %v60
    %v655 = vpop.permute.xlu0 %654
    %657 = vset.pattern.permute.xlu0 2
    %658 = vperm.xlu0 %657, %v61
    %v659 = vpop.permute.xlu0 %658
    %661 = vset.pattern.permute.xlu0 2
    %662 = vperm.xlu0 %661, %v62
    %v663 = vpop.permute.xlu0 %662
    %665 = vset.pattern.permute.xlu0 2
    %666 = vperm.xlu0 %665, %v63
    %v667 = vpop.permute.xlu0 %666
    %669 = vset.pattern.permute.xlu0 2
    %670 = vperm.xlu0 %669, %v64
    %v671 = vpop.permute.xlu0 %670
    %673 = vset.pattern.permute.xlu0 2
    %674 = vperm.xlu0 %673, %v65
    %v675 = vpop.permute.xlu0 %674
    %677 = vmatprep.subr.mxu0 0.0
    %678 = vmatpush1.msra.mxu0 %v581
    %679 = vmatprep.subr.mxu0 0.0
    %680 = vmatpush1.msra.mxu0 %v582
    %681 = vmatprep.subr.mxu0 0.0
    %682 = vmatpush1.msra.mxu0 %v583
    %683 = vmatprep.subr.mxu0 0.0
    %684 = vmatpush1.msra.mxu0 %v584
    %685 = vmatprep.subr.mxu0 0.0
    %686 = vmatpush1.msra.mxu0 %v585
    %687 = vmatprep.subr.mxu0 0.0
    %688 = vmatpush1.msra.mxu0 %v586
    %689 = vmatprep.subr.mxu0 0.0
    %690 = vmatpush1.msra.mxu0 %v587
    %691 = vmatprep.subr.mxu0 0.0
    %692 = vmatpush1.msra.mxu0 %v588
    %693 = vmatprep.subr.mxu0 0.0
    %694 = vmatpush1.msra.mxu0 %v589
    %695 = vmatprep.subr.mxu0 0.0
    %696 = vmatpush1.msra.mxu0 %v590
    %697 = vmatprep.subr.mxu0 0.0
    %698 = vmatpush1.msra.mxu0 %v591
    %699 = vmatprep.subr.mxu0 0.0
    %700 = vmatpush1.msra.mxu0 %v592
    %701 = vmatprep.subr.mxu0 0.0
    %702 = vmatpush1.msra.mxu0 %v593
    %703 = vmatprep.subr.mxu0 0.0
    %704 = vmatpush1.msra.mxu0 %v594
    %705 = vmatprep.subr.mxu0 0.0
    %706 = vmatpush1.msra.mxu0 %v595
    %707 = vmatprep.subr.mxu0 0.0
    %708 = vmatpush1.msra.mxu0 %v596
    %709 = vmatprep.subr.mxu0 0.0
    %710 = vmatpush1.msra.mxu0 0.0
    %711 = vmatprep.subr.mxu0 0.0
    %712 = vmatpush1.msra.mxu0 0.0
    %713 = vmatprep.subr.mxu0 0.0
    %714 = vmatpush1.msra.mxu0 0.0
    %715 = vmatprep.subr.mxu0 0.0
    %716 = vmatpush1.msra.mxu0 0.0
    %717 = vmatprep.subr.mxu0 0.0
    %718 = vmatpush1.msra.mxu0 0.0
    %719 = vmatprep.subr.mxu0 0.0
    %720 = vmatpush1.msra.mxu0 0.0
    %721 = vmatprep.subr.mxu0 0.0
    %722 = vmatpush1.msra.mxu0 0.0
    %723 = vmatprep.subr.mxu0 0.0
    %724 = vmatpush1.msra.mxu0 0.0
    %725 = vmatprep.subr.mxu0 0.0
    %726 = vmatpush1.msra.mxu0 0.0
    %727 = vmatprep.subr.mxu0 0.0
    %728 = vmatpush1.msra.mxu0 0.0
    %729 = vmatprep.subr.mxu0 0.0
    %730 = vmatpush1.msra.mxu0 0.0
    %731 = vmatprep.subr.mxu0 0.0
    %732 = vmatpush1.msra.mxu0 0.0
    %733 = vmatprep.subr.mxu0 0.0
    %734 = vmatpush1.msra.mxu0 0.0
    %735 = vmatprep.subr.mxu0 0.0
    %736 = vmatpush1.msra.mxu0 0.0
    %737 = vmatprep.subr.mxu0 0.0
    %738 = vmatpush1.msra.mxu0 0.0
    %739 = vmatprep.subr.mxu0 0.0
    %740 = vmatpush1.msra.mxu0 0.0
    %741 = vmatprep.mubr.f32.mxu0 0.0
    %742 = vmatmul.mubr.f32.gmra.mrb[0].mxu0 %v597
    %v743 = vpop.f32.mrb[0].mxu0
    %v744 = vadd.f32 %v615, %v743
    %v745 = vpop.f32.mrb[0].mxu0
    %746 = vmatprep.mubr.f32.mxu0 0.0
    %747 = vmatmul.mubr.f32.gmra.mrb[0].mxu0 %v598
    %v748 = vpop.f32.mrb[0].mxu0
    %v749 = vadd.f32 %v619, %v748
    %v750 = vpop.f32.mrb[0].mxu0
    %751 = vmatprep.mubr.f32.mxu0 0.0
    %752 = vmatmul.mubr.f32.gmra.mrb[0].mxu0 %v599
    %v753 = vpop.f32.mrb[0].mxu0
    %v754 = vadd.f32 %v623, %v753
    %v755 = vpop.f32.mrb[0].mxu0
    %756 = vmatprep.mubr.f32.mxu0 0.0
    %757 = vmatmul.mubr.f32.gmra.mrb[0].mxu0 %v600
    %v758 = vpop.f32.mrb[0].mxu0
    %v759 = vadd.f32 %v627, %v758
    %v760 = vpop.f32.mrb[0].mxu0
    %761 = vmatprep.mubr.f32.mxu0 0.0
    %762 = vmatmul.mubr.f32.gmra.mrb[0].mxu0 %v601
    %v763 = vpop.f32.mrb[0].mxu0
    %v764 = vadd.f32 %v631, %v763
    %v765 = vpop.f32.mrb[0].mxu0
    %766 = vmatprep.mubr.f32.mxu0 0.0
    %767 = vmatmul.mubr.f32.gmra.mrb[0].mxu0 %v602
    %v768 = vpop.f32.mrb[0].mxu0
    %v769 = vadd.f32 %v635, %v768
    %v770 = vpop.f32.mrb[0].mxu0
    %771 = vmatprep.mubr.f32.mxu0 0.0
    %772 = vmatmul.mubr.f32.gmra.mrb[0].mxu0 %v603
    %v773 = vpop.f32.mrb[0].mxu0
    %v774 = vadd.f32 %v639, %v773
    %v775 = vpop.f32.mrb[0].mxu0
    %776 = vmatprep.mubr.f32.mxu0 0.0
    %777 = vmatmul.mubr.f32.gmra.mrb[0].mxu0 %v604
    %v778 = vpop.f32.mrb[0].mxu0
    %v779 = vadd.f32 %v643, %v778
    %v780 = vpop.f32.mrb[0].mxu0
    %781 = vmatprep.mubr.f32.mxu0 0.0
    %782 = vmatmul.mubr.f32.gmra.mrb[0].mxu0 %v605
    %v783 = vpop.f32.mrb[0].mxu0
    %v784 = vadd.f32 %v647, %v783
    %v785 = vpop.f32.mrb[0].mxu0
    %786 = vmatprep.mubr.f32.mxu0 0.0
    %787 = vmatmul.mubr.f32.gmra.mrb[0].mxu0 %v606
    %v788 = vpop.f32.mrb[0].mxu0
    %v789 = vadd.f32 %v651, %v788
    %v790 = vpop.f32.mrb[0].mxu0
    %791 = vmatprep.mubr.f32.mxu0 0.0
    %792 = vmatmul.mubr.f32.gmra.mrb[0].mxu0 %v607
    %v793 = vpop.f32.mrb[0].mxu0
    %v794 = vadd.f32 %v655, %v793
    %v795 = vpop.f32.mrb[0].mxu0
    %796 = vmatprep.mubr.f32.mxu0 0.0
    %797 = vmatmul.mubr.f32.gmra.mrb[0].mxu0 %v608
    %v798 = vpop.f32.mrb[0].mxu0
    %v799 = vadd.f32 %v659, %v798
    %v800 = vpop.f32.mrb[0].mxu0
    %801 = vmatprep.mubr.f32.mxu0 0.0
    %802 = vmatmul.mubr.f32.gmra.mrb[0].mxu0 %v609
    %v803 = vpop.f32.mrb[0].mxu0
    %v804 = vadd.f32 %v663, %v803
    %v805 = vpop.f32.mrb[0].mxu0
    %806 = vmatprep.mubr.f32.mxu0 0.0
    %807 = vmatmul.mubr.f32.gmra.mrb[0].mxu0 %v610
    %v808 = vpop.f32.mrb[0].mxu0
    %v809 = vadd.f32 %v667, %v808
    %v810 = vpop.f32.mrb[0].mxu0
    %811 = vmatprep.mubr.f32.mxu0 0.0
    %812 = vmatmul.mubr.f32.gmra.mrb[0].mxu0 %v611
    %v813 = vpop.f32.mrb[0].mxu0
    %v814 = vadd.f32 %v671, %v813
    %v815 = vpop.f32.mrb[0].mxu0
    %816 = vmatprep.mubr.f32.mxu0 0.0
    %817 = vmatmul.mubr.f32.gmra.mrb[0].mxu0 %v612
    %v818 = vpop.f32.mrb[0].mxu0
    %v819 = vadd.f32 %v675, %v818
    %v820 = vpop.f32.mrb[0].mxu0
    %821 = vdwg.mxu0
    %v822 = vmax.f32 %v744, 0.0
    %v823 = vmax.f32 %v749, 0.0
    %v824 = vmax.f32 %v754, 0.0
    %v825 = vmax.f32 %v759, 0.0
    %v826 = vmax.f32 %v764, 0.0
    %v827 = vmax.f32 %v769, 0.0
    %v828 = vmax.f32 %v774, 0.0
    %v829 = vmax.f32 %v779, 0.0
    %v830 = vmax.f32 %v784, 0.0
    %v831 = vmax.f32 %v789, 0.0
    %v832 = vmax.f32 %v794, 0.0
    %v833 = vmax.f32 %v799, 0.0
    %v834 = vmax.f32 %v804, 0.0
    %v835 = vmax.f32 %v809, 0.0
    %v836 = vmax.f32 %v814, 0.0
    %v837 = vmax.f32 %v819, 0.0
    %v838 = vld [vmem:[#allocation2 + $0x100] sm:$0xff]
    %v839 = vld [vmem:[#allocation2 + $0x108] sm:$0xff]
    %v840 = vld [vmem:[#allocation2 + $0x110] sm:$0xff]
    %v841 = vld [vmem:[#allocation2 + $0x118] sm:$0xff]
    %v842 = vld [vmem:[#allocation2 + $0x120] sm:$0xff]
    %v843 = vld [vmem:[#allocation2 + $0x128] sm:$0xff]
    %v844 = vld [vmem:[#allocation2 + $0x130] sm:$0xff]
    %v845 = vld [vmem:[#allocation2 + $0x138] sm:$0xff]
    %v846 = vld [vmem:[#allocation2 + $0x140] sm:$0xff]
    %v847 = vld [vmem:[#allocation2 + $0x148] sm:$0xff]
    %v848 = vld [vmem:[#allocation2 + $0x150] sm:$0xff]
    %v849 = vld [vmem:[#allocation2 + $0x158] sm:$0xff]
    %v850 = vld [vmem:[#allocation2 + $0x160] sm:$0xff]
    %v851 = vld [vmem:[#allocation2 + $0x168] sm:$0xff]
    %v852 = vld [vmem:[#allocation2 + $0x170] sm:$0xff]
    %v853 = vld [vmem:[#allocation2 + $0x178] sm:$0xff]
    %854 = vset.pattern.permute.xlu0 3
    %855 = vperm.xlu0 %854, %v50
    %v856 = vpop.permute.xlu0 %855
    %858 = vset.pattern.permute.xlu0 3
    %859 = vperm.xlu0 %858, %v51
    %v860 = vpop.permute.xlu0 %859
    %862 = vset.pattern.permute.xlu0 3
    %863 = vperm.xlu0 %862, %v52
    %v864 = vpop.permute.xlu0 %863
    %866 = vset.pattern.permute.xlu0 3
    %867 = vperm.xlu0 %866, %v53
    %v868 = vpop.permute.xlu0 %867
    %870 = vset.pattern.permute.xlu0 3
    %871 = vperm.xlu0 %870, %v54
    %v872 = vpop.permute.xlu0 %871
    %874 = vset.pattern.permute.xlu0 3
    %875 = vperm.xlu0 %874, %v55
    %v876 = vpop.permute.xlu0 %875
    %878 = vset.pattern.permute.xlu0 3
    %879 = vperm.xlu0 %878, %v56
    %v880 = vpop.permute.xlu0 %879
    %882 = vset.pattern.permute.xlu0 3
    %883 = vperm.xlu0 %882, %v57
    %v884 = vpop.permute.xlu0 %883
    %886 = vset.pattern.permute.xlu0 3
    %887 = vperm.xlu0 %886, %v58
    %v888 = vpop.permute.xlu0 %887
    %890 = vset.pattern.permute.xlu0 3
    %891 = vperm.xlu0 %890, %v59
    %v892 = vpop.permute.xlu0 %891
    %894 = vset.pattern.permute.xlu0 3
    %895 = vperm.xlu0 %894, %v60
    %v896 = vpop.permute.xlu0 %895
    %898 = vset.pattern.permute.xlu0 3
    %899 = vperm.xlu0 %898, %v61
    %v900 = vpop.permute.xlu0 %899
    %902 = vset.pattern.permute.xlu0 3
    %903 = vperm.xlu0 %902, %v62
    %v904 = vpop.permute.xlu0 %903
    %906 = vset.pattern.permute.xlu0 3
    %907 = vperm.xlu0 %906, %v63
    %v908 = vpop.permute.xlu0 %907
    %910 = vset.pattern.permute.xlu0 3
    %911 = vperm.xlu0 %910, %v64
    %v912 = vpop.permute.xlu0 %911
    %914 = vset.pattern.permute.xlu0 3
    %915 = vperm.xlu0 %914, %v65
    %v916 = vpop.permute.xlu0 %915
    %918 = vmatprep.subr.mxu0 0.0
    %919 = vmatpush1.msra.mxu0 %v822
    %920 = vmatprep.subr.mxu0 0.0
    %921 = vmatpush1.msra.mxu0 %v823
    %922 = vmatprep.subr.mxu0 0.0
    %923 = vmatpush1.msra.mxu0 %v824
    %924 = vmatprep.subr.mxu0 0.0
    %925 = vmatpush1.msra.mxu0 %v825
    %926 = vmatprep.subr.mxu0 0.0
    %927 = vmatpush1.msra.mxu0 %v826
    %928 = vmatprep.subr.mxu0 0.0
    %929 = vmatpush1.msra.mxu0 %v827
    %930 = vmatprep.subr.mxu0 0.0
    %931 = vmatpush1.msra.mxu0 %v828
    %932 = vmatprep.subr.mxu0 0.0
    %933 = vmatpush1.msra.mxu0 %v829
    %934 = vmatprep.subr.mxu0 0.0
    %935 = vmatpush1.msra.mxu0 %v830
    %936 = vmatprep.subr.mxu0 0.0
    %937 = vmatpush1.msra.mxu0 %v831
    %938 = vmatprep.subr.mxu0 0.0
    %939 = vmatpush1.msra.mxu0 %v832
    %940 = vmatprep.subr.mxu0 0.0
    %941 = vmatpush1.msra.mxu0 %v833
    %942 = vmatprep.subr.mxu0 0.0
    %943 = vmatpush1.msra.mxu0 %v834
    %944 = vmatprep.subr.mxu0 0.0
    %945 = vmatpush1.msra.mxu0 %v835
    %946 = vmatprep.subr.mxu0 0.0
    %947 = vmatpush1.msra.mxu0 %v836
    %948 = vmatprep.subr.mxu0 0.0
    %949 = vmatpush1.msra.mxu0 %v837
    %950 = vmatprep.subr.mxu0 0.0
    %951 = vmatpush1.msra.mxu0 0.0
    %952 = vmatprep.subr.mxu0 0.0
    %953 = vmatpush1.msra.mxu0 0.0
    %954 = vmatprep.subr.mxu0 0.0
    %955 = vmatpush1.msra.mxu0 0.0
    %956 = vmatprep.subr.mxu0 0.0
    %957 = vmatpush1.msra.mxu0 0.0
    %958 = vmatprep.subr.mxu0 0.0
    %959 = vmatpush1.msra.mxu0 0.0
    %960 = vmatprep.subr.mxu0 0.0
    %961 = vmatpush1.msra.mxu0 0.0
    %962 = vmatprep.subr.mxu0 0.0
    %963 = vmatpush1.msra.mxu0 0.0
    %964 = vmatprep.subr.mxu0 0.0
    %965 = vmatpush1.msra.mxu0 0.0
    %966 = vmatprep.subr.mxu0 0.0
    %967 = vmatpush1.msra.mxu0 0.0
    %968 = vmatprep.subr.mxu0 0.0
    %969 = vmatpush1.msra.mxu0 0.0
    %970 = vmatprep.subr.mxu0 0.0
    %971 = vmatpush1.msra.mxu0 0.0
    %972 = vmatprep.subr.mxu0 0.0
    %973 = vmatpush1.msra.mxu0 0.0
    %974 = vmatprep.subr.mxu0 0.0
    %975 = vmatpush1.msra.mxu0 0.0
    %976 = vmatprep.subr.mxu0 0.0
    %977 = vmatpush1.msra.mxu0 0.0
    %978 = vmatprep.subr.mxu0 0.0
    %979 = vmatpush1.msra.mxu0 0.0
    %980 = vmatprep.subr.mxu0 0.0
    %981 = vmatpush1.msra.mxu0 0.0
    %982 = vmatprep.mubr.f32.mxu0 0.0
    %983 = vmatmul.mubr.f32.gmra.mrb[0].mxu0 %v838
    %v984 = vpop.f32.mrb[0].mxu0
    %v985 = vadd.f32 %v856, %v984
    %v986 = vpop.f32.mrb[0].mxu0
    %987 = vmatprep.mubr.f32.mxu0 0.0
    %988 = vmatmul.mubr.f32.gmra.mrb[0].mxu0 %v839
    %v989 = vpop.f32.mrb[0].mxu0
    %v990 = vadd.f32 %v860, %v989
    %v991 = vpop.f32.mrb[0].mxu0
    %992 = vmatprep.mubr.f32.mxu0 0.0
    %993 = vmatmul.mubr.f32.gmra.mrb[0].mxu0 %v840
    %v994 = vpop.f32.mrb[0].mxu0
    %v995 = vadd.f32 %v864, %v994
    %v996 = vpop.f32.mrb[0].mxu0
    %997 = vmatprep.mubr.f32.mxu0 0.0
    %998 = vmatmul.mubr.f32.gmra.mrb[0].mxu0 %v841
    %v999 = vpop.f32.mrb[0].mxu0
    %v1000 = vadd.f32 %v868, %v999
    %v1001 = vpop.f32.mrb[0].mxu0
    %1002 = vmatprep.mubr.f32.mxu0 0.0
    %1003 = vmatmul.mubr.f32.gmra.mrb[0].mxu0 %v842
    %v1004 = vpop.f32.mrb[0].mxu0
    %v1005 = vadd.f32 %v872, %v1004
    %v1006 = vpop.f32.mrb[0].mxu0
    %1007 = vmatprep.mubr.f32.mxu0 0.0
    %1008 = vmatmul.mubr.f32.gmra.mrb[0].mxu0 %v843
    %v1009 = vpop.f32.mrb[0].mxu0
    %v1010 = vadd.f32 %v876, %v1009
    %v1011 = vpop.f32.mrb[0].mxu0
    %1012 = vmatprep.mubr.f32.mxu0 0.0
    %1013 = vmatmul.mubr.f32.gmra.mrb[0].mxu0 %v844
    %v1014 = vpop.f32.mrb[0].mxu0
    %v1015 = vadd.f32 %v880, %v1014
    %v1016 = vpop.f32.mrb[0].mxu0
    %1017 = vmatprep.mubr.f32.mxu0 0.0
    %1018 = vmatmul.mubr.f32.gmra.mrb[0].mxu0 %v845
    %v1019 = vpop.f32.mrb[0].mxu0
    %v1020 = vadd.f32 %v884, %v1019
    %v1021 = vpop.f32.mrb[0].mxu0
    %1022 = vmatprep.mubr.f32.mxu0 0.0
    %1023 = vmatmul.mubr.f32.gmra.mrb[0].mxu0 %v846
    %v1024 = vpop.f32.mrb[0].mxu0
    %v1025 = vadd.f32 %v888, %v1024
    %v1026 = vpop.f32.mrb[0].mxu0
    %1027 = vmatprep.mubr.f32.mxu0 0.0
    %1028 = vmatmul.mubr.f32.gmra.mrb[0].mxu0 %v847
    %v1029 = vpop.f32.mrb[0].mxu0
    %v1030 = vadd.f32 %v892, %v1029
    %v1031 = vpop.f32.mrb[0].mxu0
    %1032 = vmatprep.mubr.f32.mxu0 0.0
    %1033 = vmatmul.mubr.f32.gmra.mrb[0].mxu0 %v848
    %v1034 = vpop.f32.mrb[0].mxu0
    %v1035 = vadd.f32 %v896, %v1034
    %v1036 = vpop.f32.mrb[0].mxu0
    %1037 = vmatprep.mubr.f32.mxu0 0.0
    %1038 = vmatmul.mubr.f32.gmra.mrb[0].mxu0 %v849
    %v1039 = vpop.f32.mrb[0].mxu0
    %v1040 = vadd.f32 %v900, %v1039
    %v1041 = vpop.f32.mrb[0].mxu0
    %1042 = vmatprep.mubr.f32.mxu0 0.0
    %1043 = vmatmul.mubr.f32.gmra.mrb[0].mxu0 %v850
    %v1044 = vpop.f32.mrb[0].mxu0
    %v1045 = vadd.f32 %v904, %v1044
    %v1046 = vpop.f32.mrb[0].mxu0
    %1047 = vmatprep.mubr.f32.mxu0 0.0
    %1048 = vmatmul.mubr.f32.gmra.mrb[0].mxu0 %v851
    %v1049 = vpop.f32.mrb[0].mxu0
    %v1050 = vadd.f32 %v908, %v1049
    %v1051 = vpop.f32.mrb[0].mxu0
    %1052 = vmatprep.mubr.f32.mxu0 0.0
    %1053 = vmatmul.mubr.f32.gmra.mrb[0].mxu0 %v852
    %v1054 = vpop.f32.mrb[0].mxu0
    %v1055 = vadd.f32 %v912, %v1054
    %v1056 = vpop.f32.mrb[0].mxu0
    %1057 = vmatprep.mubr.f32.mxu0 0.0
    %1058 = vmatmul.mubr.f32.gmra.mrb[0].mxu0 %v853
    %v1059 = vpop.f32.mrb[0].mxu0
    %v1060 = vadd.f32 %v916, %v1059
    %v1061 = vpop.f32.mrb[0].mxu0
    %1062 = vdwg.mxu0
    %v1063 = vmax.f32 %v985, 0.0
    %v1064 = vmax.f32 %v990, 0.0
    %v1065 = vmax.f32 %v995, 0.0
    %v1066 = vmax.f32 %v1000, 0.0
    %v1067 = vmax.f32 %v1005, 0.0
    %v1068 = vmax.f32 %v1010, 0.0
    %v1069 = vmax.f32 %v1015, 0.0
    %v1070 = vmax.f32 %v1020, 0.0
    %v1071 = vmax.f32 %v1025, 0.0
    %v1072 = vmax.f32 %v1030, 0.0
    %v1073 = vmax.f32 %v1035, 0.0
    %v1074 = vmax.f32 %v1040, 0.0
    %v1075 = vmax.f32 %v1045, 0.0
    %v1076 = vmax.f32 %v1050, 0.0
    %v1077 = vmax.f32 %v1055, 0.0
    %v1078 = vmax.f32 %v1060, 0.0
    %v1079 = vld [vmem:[#allocation2 + $0x180] sm:$0xff]
    %v1080 = vld [vmem:[%s3] sm:$0xff]
    %1082 = vset.pattern.permute.xlu0 4
    %1083 = vperm.xlu0 %1082, %v1080
    %v1084 = vpop.permute.xlu0 %1083
    %1086 = vmatprep.subr.mxu0 0.0
    %1087 = vmatpush1.msra.mxu0 %v1063
    %1088 = vmatprep.subr.mxu0 0.0
    %1089 = vmatpush1.msra.mxu0 %v1064
    %1090 = vmatprep.subr.mxu0 0.0
    %1091 = vmatpush1.msra.mxu0 %v1065
    %1092 = vmatprep.subr.mxu0 0.0
    %1093 = vmatpush1.msra.mxu0 %v1066
    %1094 = vmatprep.subr.mxu0 0.0
    %1095 = vmatpush1.msra.mxu0 %v1067
    %1096 = vmatprep.subr.mxu0 0.0
    %1097 = vmatpush1.msra.mxu0 %v1068
    %1098 = vmatprep.subr.mxu0 0.0
    %1099 = vmatpush1.msra.mxu0 %v1069
    %1100 = vmatprep.subr.mxu0 0.0
    %1101 = vmatpush1.msra.mxu0 %v1070
    %1102 = vmatprep.subr.mxu0 0.0
    %1103 = vmatpush1.msra.mxu0 %v1071
    %1104 = vmatprep.subr.mxu0 0.0
    %1105 = vmatpush1.msra.mxu0 %v1072
    %1106 = vmatprep.subr.mxu0 0.0
    %1107 = vmatpush1.msra.mxu0 %v1073
    %1108 = vmatprep.subr.mxu0 0.0
    %1109 = vmatpush1.msra.mxu0 %v1074
    %1110 = vmatprep.subr.mxu0 0.0
    %1111 = vmatpush1.msra.mxu0 %v1075
    %1112 = vmatprep.subr.mxu0 0.0
    %1113 = vmatpush1.msra.mxu0 %v1076
    %1114 = vmatprep.subr.mxu0 0.0
    %1115 = vmatpush1.msra.mxu0 %v1077
    %1116 = vmatprep.subr.mxu0 0.0
    %1117 = vmatpush1.msra.mxu0 %v1078
    %1118 = vmatprep.subr.mxu0 0.0
    %1119 = vmatpush1.msra.mxu0 0.0
    %1120 = vmatprep.subr.mxu0 0.0
    %1121 = vmatpush1.msra.mxu0 0.0
    %1122 = vmatprep.subr.mxu0 0.0
    %1123 = vmatpush1.msra.mxu0 0.0
    %1124 = vmatprep.subr.mxu0 0.0
    %1125 = vmatpush1.msra.mxu0 0.0
    %1126 = vmatprep.subr.mxu0 0.0
    %1127 = vmatpush1.msra.mxu0 0.0
    %1128 = vmatprep.subr.mxu0 0.0
    %1129 = vmatpush1.msra.mxu0 0.0
    %1130 = vmatprep.subr.mxu0 0.0
    %1131 = vmatpush1.msra.mxu0 0.0
    %1132 = vmatprep.subr.mxu0 0.0
    %1133 = vmatpush1.msra.mxu0 0.0
    %1134 = vmatprep.subr.mxu0 0.0
    %1135 = vmatpush1.msra.mxu0 0.0
    %1136 = vmatprep.subr.mxu0 0.0
    %1137 = vmatpush1.msra.mxu0 0.0
    %1138 = vmatprep.subr.mxu0 0.0
    %1139 = vmatpush1.msra.mxu0 0.0
    %1140 = vmatprep.subr.mxu0 0.0
    %1141 = vmatpush1.msra.mxu0 0.0
    %1142 = vmatprep.subr.mxu0 0.0
    %1143 = vmatpush1.msra.mxu0 0.0
    %1144 = vmatprep.subr.mxu0 0.0
    %1145 = vmatpush1.msra.mxu0 0.0
    %1146 = vmatprep.subr.mxu0 0.0
    %1147 = vmatpush1.msra.mxu0 0.0
    %1148 = vmatprep.subr.mxu0 0.0
    %1149 = vmatpush1.msra.mxu0 0.0
    %1150 = vmatprep.mubr.f32.mxu0 0.0
    %1151 = vmatmul.mubr.f32.gmra.mrb[0].mxu0 %v1079
    %v1152 = vpop.f32.mrb[0].mxu0
    %v1153 = vadd.f32 %v1084, %v1152
    %v1154 = vpop.f32.mrb[0].mxu0
    %1155 = vdwg.mxu0
    %1156 = vst [vmem:[#allocation5] sm:$0xff] %v1153
    // Predicated region
    $region22: #{tpu_custom_call.1} parent=1 // pred_check
      _
    $region23: #{tpu_custom_call.1} parent=1 // pred_check_branch
      %1158 = sbr.rel (0) target = $region25
    $region24: #{tpu_custom_call.1} parent=1 // pred_region
      %s1160 = ssub.s32 128, 128
      %1161 = vsyncadd [#allocation4], %s1160
      %s1163 = sshll.u32 [#allocation5], 4
      %s1164 = int_to_ptr.vmem [resolvable:$true] %s1163
      %1166 = dma.vmem_to_hbm [thread:$0]  %s1164, 128, %s4, [#allocation4]
    $region25: #{tpu_custom_call.1} parent=1 // pred_fallthru
      _
    // Predicated region
    $region26: #{tpu_custom_call.1} parent=1 // pred_check
      _
    $region27: #{tpu_custom_call.1} parent=1 // pred_check_branch
      %1168 = sbr.rel (0) target = $region29
    $region28: #{tpu_custom_call.1} parent=1 // pred_region
      %1169 = dma.done [#allocation4], 128
    $region29: #{tpu_custom_call.1} parent=1 // pred_fallthru
      _
    %1170 = vsyncpa [#allocation3], 1
    %1171 = vsyncpa [#allocation4], 1

</llo_original>
